<compile_context>
chip_gen: v7x
topology: tpu7x:2x2x1
jax: 0.10.0
libtpu: 0.0.40
codegen_flags: <defaults>
</compile_context>

<pallas_src>
import functools

import jax
import jax.numpy as jnp
from jax import lax
from jax.experimental import pallas as pl
from jax.experimental.pallas import tpu as pltpu


def _round_up(x, m):
    return ((x + m - 1) // m) * m


def _vmem_limit_bytes():
    """Generation-aware scoped-VMEM budget (v5e/v6e 128 MiB, v7x 64 MiB)."""
    cap = 64 * 1024 * 1024  # conservative default == v7x physical VMEM
    try:
        info = pltpu.get_tpu_info()
        cap = int(getattr(info, "vmem_capacity_bytes", cap) or cap)
    except Exception:
        pass
    return int(min(cap * 3 // 4, 100 * 1024 * 1024))


VMEM_LIMIT = _vmem_limit_bytes()


# ----------------------------------------------------------------------------
# Kernel 1: 1x1 conv (input_proj).  x is already (B, HW_pad, C_pad) bf16, so
# the dot is a natural [THW, C] x [C, D] MXU feed; the full channel dim stays
# resident (no K grid axis, no accumulator, weight DMA'd once).
# Grid: (batch, pixel-tiles), both "parallel".
# ----------------------------------------------------------------------------
def _input_proj_kernel(x_ref, w_ref, b_ref, o_ref):
    o_ref[0] = (
        jnp.dot(x_ref[0], w_ref[...], preferred_element_type=jnp.float32)
        + b_ref[...]
    ).astype(o_ref.dtype)


def input_proj(src_nchw, w, b, hw_pad):
    """1x1 Conv2d: [B, C, H, W] -> [B, HW_pad, D] (bf16 token sequence)."""
    B, C, H, W = src_nchw.shape
    D = w.shape[1]
    HW = H * W

    C_pad = _round_up(C, 16)            # bf16 sublane packing
    THW = min(512, hw_pad)              # hw_pad is a multiple of THW

    # Fold NCHW -> (B, HW, C) permute into the same pad + bf16-cast pass that
    # already reads/writes the whole feature map (single XLA fusion, no
    # standalone HBM transpose and no in-kernel XLU transposes).
    x = jnp.transpose(src_nchw.reshape(B, C, HW), (0, 2, 1))
    x = jnp.pad(x, ((0, 0), (0, hw_pad - HW), (0, C_pad - C))).astype(jnp.bfloat16)
    w_p = jnp.pad(w, ((0, C_pad - C), (0, 0))).astype(jnp.bfloat16)
    b_p = b.reshape(1, D).astype(jnp.float32)

    out = pl.pallas_call(
        _input_proj_kernel,
        out_shape=jax.ShapeDtypeStruct((B, hw_pad, D), jnp.bfloat16),
        grid=(B, hw_pad // THW),
        in_specs=[
            pl.BlockSpec((1, THW, C_pad), lambda bi, ti: (bi, ti, 0)),
            pl.BlockSpec((C_pad, D), lambda bi, ti: (0, 0)),
            pl.BlockSpec((1, D), lambda bi, ti: (0, 0)),
        ],
        out_specs=pl.BlockSpec((1, THW, D), lambda bi, ti: (bi, ti, 0)),
        compiler_params=pltpu.CompilerParams(
            dimension_semantics=("parallel", "parallel"),
            vmem_limit_bytes=VMEM_LIMIT),
    )(x, w_p, b_p)
    return out                                   # [B, HW_pad, D] bf16


# ----------------------------------------------------------------------------
# Kernel 2: flash-style masked cross-attention (transformer stand-in) with the
# prediction heads fused into the last-chunk epilogue.
# Grid: (batch, Q-tiles, HW-chunks) -> ("parallel", "parallel", "arbitrary").
# ----------------------------------------------------------------------------
def _attn_heads_kernel(q_ref, mem_ref, pos_ref, bias_ref,
                       wc_ref, bc_ref, w1_ref, b1_ref, w2_ref, b2_ref,
                       w3_ref, b3_ref,
                       logits_ref, boxes_ref,
                       m_sc, l_sc, acc_sc, *, scale):
    ki = pl.program_id(2)

    @pl.when(ki == 0)
    def _():
        m_sc[...] = jnp.full_like(m_sc, -jnp.inf)
        l_sc[...] = jnp.zeros_like(l_sc)
        acc_sc[...] = jnp.zeros_like(acc_sc)

    q = q_ref[...]                      # (TQ, D)    bf16 object queries
    mem = mem_ref[0]                    # (THW, D)   bf16 memory chunk (values)
    pos = pos_ref[0]                    # (THW, D)   bf16 positional encoding
    bias = bias_ref[0]                  # (1, THW)   f32 additive mask bias

    k = mem + pos                       # DETR adds pos encoding to keys
    # contract last dims: (TQ, D) x (THW, D) -> (TQ, THW), no K transpose copy
    s = lax.dot_general(q, k, (((1,), (1,)), ((), ())),
                        preferred_element_type=jnp.float32) * scale + bias

    m_prev = m_sc[...]
    m_new = jnp.maximum(m_prev, jnp.max(s, axis=-1, keepdims=True))
    alpha = jnp.exp(m_prev - m_new)
    p = jnp.exp(s - m_new)
    l_sc[...] = alpha * l_sc[...] + jnp.sum(p, axis=-1, keepdims=True)
    acc_sc[...] = alpha * acc_sc[...] + jnp.dot(
        p.astype(jnp.bfloat16), mem, preferred_element_type=jnp.float32)
    m_sc[...] = m_new

    @pl.when(ki == pl.num_programs(2) - 1)
    def _():
        # NOTE: approx reciprocal (EUP slot) -> softmax rows sum to 1 +- ~2^-12;
        # acceptable inference precision trade.
        hs = (acc_sc[...] * pl.reciprocal(l_sc[...], approx=True)
              ).astype(jnp.bfloat16)
        # class_embed: Linear(D -> num_classes+1), lane-padded to 128
        logits_ref[0] = (
            jnp.dot(hs, wc_ref[...], preferred_element_type=jnp.float32)
            + bc_ref[...])
        # bbox_embed: 3-layer MLP with ReLU, then sigmoid, lane-padded to 128
        x = jnp.maximum(
            jnp.dot(hs, w1_ref[...], preferred_element_type=jnp.float32)
            + b1_ref[...], 0.0)
        x = jnp.maximum(
            jnp.dot(x.astype(jnp.bfloat16), w2_ref[...],
                    preferred_element_type=jnp.float32) + b2_ref[...], 0.0)
        x = (jnp.dot(x.astype(jnp.bfloat16), w3_ref[...],
                     preferred_element_type=jnp.float32) + b3_ref[...])
        boxes_ref[0] = jax.nn.sigmoid(x)


def attention_and_heads(query_embed_pad, memory, pos_pad, attn_bias, params):
    """hs = softmax(Q (M+pos)^T / sqrt(D) + bias) M, then class/box heads."""
    B, HWp, D = memory.shape
    Qp = query_embed_pad.shape[0]
    NC1 = params["wc"].shape[1]          # num_classes + 1
    NC1_pad = _round_up(NC1, 128)        # lane-dense logits
    BOX_pad = 128                        # lane-dense box pre-activations

    TQ = 64 if Qp % 64 == 0 else Qp      # >=2 parallel Q steps (v7x megacore)
    THW = min(512, HWp)                  # HWp is a multiple of THW

    wc = jnp.pad(params["wc"], ((0, 0), (0, NC1_pad - NC1))).astype(jnp.bfloat16)
    bc = jnp.pad(params["bc"], (0, NC1_pad - NC1)).reshape(1, NC1_pad).astype(jnp.float32)
    w1 = params["w1"].astype(jnp.bfloat16)
    b1 = params["b1"].reshape(1, D).astype(jnp.float32)
    w2 = params["w2"].astype(jnp.bfloat16)
    b2 = params["b2"].reshape(1, D).astype(jnp.float32)
    w3 = jnp.pad(params["w3"], ((0, 0), (0, BOX_pad - 4))).astype(jnp.bfloat16)
    b3 = jnp.pad(params["b3"], (0, BOX_pad - 4)).reshape(1, BOX_pad).astype(jnp.float32)

    kern = functools.partial(_attn_heads_kernel, scale=1.0 / float(D) ** 0.5)
    const = lambda r, c: pl.BlockSpec((r, c), lambda bi, qi, ki: (0, 0))

    logits, boxes = pl.pallas_call(
        kern,
        out_shape=(
            jax.ShapeDtypeStruct((B, Qp, NC1_pad), jnp.float32),
            jax.ShapeDtypeStruct((B, Qp, BOX_pad), jnp.float32),
        ),
        grid=(B, Qp // TQ, HWp // THW),
        in_specs=[
            pl.BlockSpec((TQ, D), lambda bi, qi, ki: (qi, 0)),
            pl.BlockSpec((1, THW, D), lambda bi, qi, ki: (bi, ki, 0)),
            pl.BlockSpec((1, THW, D), lambda bi, qi, ki: (bi, ki, 0)),
            pl.BlockSpec((1, 1, THW), lambda bi, qi, ki: (bi, 0, ki)),
            const(D, NC1_pad), const(1, NC1_pad),
            const(D, D), const(1, D),
            const(D, D), const(1, D),
            const(D, BOX_pad), const(1, BOX_pad),
        ],
        out_specs=(
            pl.BlockSpec((1, TQ, NC1_pad), lambda bi, qi, ki: (bi, qi, 0)),
            pl.BlockSpec((1, TQ, BOX_pad), lambda bi, qi, ki: (bi, qi, 0)),
        ),
        scratch_shapes=[
            pltpu.VMEM((TQ, 1), jnp.float32),   # running max  m
            pltpu.VMEM((TQ, 1), jnp.float32),   # running sum  l
            pltpu.VMEM((TQ, D), jnp.float32),   # running acc  (P @ V)
        ],
        compiler_params=pltpu.CompilerParams(
            dimension_semantics=("parallel", "parallel", "arbitrary"),
            vmem_limit_bytes=VMEM_LIMIT),
    )(query_embed_pad, memory, pos_pad, attn_bias,
      wc, bc, w1, b1, w2, b2, w3, b3)
    return logits, boxes                 # lane-padded [B, Qp, 128*]


# ----------------------------------------------------------------------------
# DETRbody forward (glue)
# ----------------------------------------------------------------------------
def detr_body(src_nchw, mask_hw, pos, params):
    B, C, H, W = src_nchw.shape
    Q = params["query_embed"].shape[0]
    NC1 = params["wc"].shape[1]
    HW = H * W

    # Large maps are padded to a 512 multiple so input_proj / attention get
    # 512-wide pixel tiles (~85% of HBM roofline vs ~29% at 128-wide tiles).
    HW_pad = _round_up(HW, 512) if HW > 256 else _round_up(HW, 128)
    Q_pad = max(128, _round_up(Q, 128))  # bf16 packing + 2-way Q split (v7x)

    # input_proj (1x1 conv) producing the token sequence [B, HW_pad, D]
    memory = input_proj(src_nchw, params["w_proj"], params["b_proj"], HW_pad)

    # padding mask: True on padded pixels; padded HW positions also masked.
    # Precomputed additive bias (no compare+select in the kernel; v5e VPU).
    mask_flat = mask_hw.reshape(B, HW)
    mask_pad = jnp.pad(mask_flat, ((0, 0), (0, HW_pad - HW)), constant_values=True)
    attn_bias = jnp.where(mask_pad, jnp.float32(-1e30),
                          jnp.float32(0.0)).reshape(B, 1, HW_pad)
    pos_pad = jnp.pad(pos, ((0, 0), (0, HW_pad - HW), (0, 0))).astype(jnp.bfloat16)

    qe = jnp.pad(params["query_embed"], ((0, Q_pad - Q), (0, 0))).astype(jnp.bfloat16)

    # NOTE: the real transformer returns hs per decoder layer and DETRbody
    # takes [-1]; the single-layer stand-in already yields that last layer.
    logits_p, boxes_p = attention_and_heads(qe, memory, pos_pad, attn_bias, params)
    return {
        "pred_logits": logits_p[:, :Q, :NC1],
        "pred_boxes": boxes_p[:, :Q, :4],
    }


def init_params(key, c_backbone, hidden_dim, num_classes, num_queries):
    ks = jax.random.split(key, 10)
    s = 0.05
    return {
        "w_proj": s * jax.random.normal(ks[0], (c_backbone, hidden_dim), jnp.float32),
        "b_proj": s * jax.random.normal(ks[1], (hidden_dim,), jnp.float32),
        "query_embed": jax.random.normal(ks[2], (num_queries, hidden_dim), jnp.float32),
        "wc": s * jax.random.normal(ks[3], (hidden_dim, num_classes + 1), jnp.float32),
        "bc": jnp.zeros((num_classes + 1,), jnp.float32),
        "w1": s * jax.random.normal(ks[4], (hidden_dim, hidden_dim), jnp.float32),
        "b1": jnp.zeros((hidden_dim,), jnp.float32),
        "w2": s * jax.random.normal(ks[5], (hidden_dim, hidden_dim), jnp.float32),
        "b2": jnp.zeros((hidden_dim,), jnp.float32),
        "w3": s * jax.random.normal(ks[6], (hidden_dim, 4), jnp.float32),
        "b3": jnp.zeros((4,), jnp.float32),
    }


if __name__ == "__main__":
    B, C, H, W = 2, 16, 8, 8       # small stand-in for ResNet50 C5 features
    HIDDEN = 32                    # transformer.d_model (256 in real DETR)
    NUM_QUERIES = 16               # 100 in real DETR
    NUM_CLASSES = 2

    key = jax.random.PRNGKey(0)
    k_src, k_pos, k_par = jax.random.split(key, 3)

    # Deterministic stand-in for backbone(samples) -> features[-1], pos[-1]
    src = jax.random.normal(k_src, (B, C, H, W), jnp.float32)          # NCHW
    pos = jax.random.normal(k_pos, (B, H * W, HIDDEN), jnp.float32)
    mask = jnp.zeros((B, H, W), dtype=jnp.bool_)
    mask = mask.at[1, :, W - 2:].set(True)        # batch 1 has padded columns

    params = init_params(k_par, C, HIDDEN, NUM_CLASSES, NUM_QUERIES)

    out = detr_body(src, mask, pos, params)
    out = jax.block_until_ready(out)

    assert out["pred_logits"].shape == (B, NUM_QUERIES, NUM_CLASSES + 1)
    assert out["pred_boxes"].shape == (B, NUM_QUERIES, 4)
    assert bool(jnp.all(jnp.isfinite(out["pred_logits"])))
    assert bool(jnp.all((out["pred_boxes"] >= 0.0) & (out["pred_boxes"] <= 1.0)))
    print("KERNEL_OK")
</pallas_src>

<mosaic_0001>
module attributes {stable_mosaic.version = 11 : i64} {
  func.func @_input_proj_kernel(%arg0: i32, %arg1: i32, %arg2: memref<1x128x16xbf16, #tpu.memory_space<vmem>>, %arg3: memref<16x32xbf16, #tpu.memory_space<vmem>>, %arg4: memref<1x32xf32, #tpu.memory_space<vmem>>, %arg5: memref<1x128x32xbf16, #tpu.memory_space<vmem>>) attributes {dimension_semantics = [#tpu.dimension_semantics<parallel>, #tpu.dimension_semantics<parallel>], iteration_bounds = array<i64: 2, 1>, scalar_prefetch = 0 : i64, scratch_operands = 0 : i64, tpu.core_type = #tpu.core_type<tc>, window_params = [{transform_indices = @transform_0, window_bounds = array<i64: 1, 128, 16>}, {pipeline_mode = #tpu.pipeline_mode<synchronous>, transform_indices = @transform_1, window_bounds = array<i64: 16, 32>}, {pipeline_mode = #tpu.pipeline_mode<synchronous>, transform_indices = @transform_2, window_bounds = array<i64: 1, 32>}, {transform_indices = @transform_3, window_bounds = array<i64: 1, 128, 32>}]} {
    %c0 = arith.constant 0 : index
    %c0_0 = arith.constant 0 : index
    %c0_1 = arith.constant 0 : index
    %0 = vector.load %arg2[%c0, %c0_0, %c0_1] : memref<1x128x16xbf16, #tpu.memory_space<vmem>>, vector<1x128x16xbf16>
    %1 = vector.shape_cast %0 : vector<1x128x16xbf16> to vector<128x16xbf16>
    %c0_2 = arith.constant 0 : index
    %c0_3 = arith.constant 0 : index
    %2 = vector.load %arg3[%c0_2, %c0_3] : memref<16x32xbf16, #tpu.memory_space<vmem>>, vector<16x32xbf16>
    %cst = arith.constant dense<0.000000e+00> : vector<128x32xf32>
    %3 = tpu.matmul %1, %2, %cst {dimension_numbers = #tpu.dot_dimension_numbers<[1], [0], [0], [1], [0, 0, 1, 1], [], []>} : vector<128x16xbf16>, vector<16x32xbf16>, vector<128x32xf32> -> vector<128x32xf32>
    %c0_4 = arith.constant 0 : index
    %c0_5 = arith.constant 0 : index
    %4 = vector.load %arg4[%c0_4, %c0_5] : memref<1x32xf32, #tpu.memory_space<vmem>>, vector<1x32xf32>
    %5 = vector.broadcast %4 : vector<1x32xf32> to vector<128x32xf32>
    %6 = arith.addf %3, %5 : vector<128x32xf32>
    %7 = arith.truncf %6 : vector<128x32xf32> to vector<128x32xbf16>
    %c0_6 = arith.constant 0 : index
    %c0_7 = arith.constant 0 : index
    %c0_8 = arith.constant 0 : index
    %8 = vector.load %arg5[%c0_6, %c0_7, %c0_8] : memref<1x128x32xbf16, #tpu.memory_space<vmem>>, vector<1x128x32xbf16>
    %9 = vector.shape_cast %8 : vector<1x128x32xbf16> to vector<128x32xbf16>
    %10 = vector.shape_cast %7 : vector<128x32xbf16> to vector<1x128x32xbf16>
    tpu.vector_store %arg5[%c0_6, %c0_7, %c0_8], %10 {strides = array<i32>} : memref<1x128x32xbf16, #tpu.memory_space<vmem>>, vector<1x128x32xbf16>,
    return
  }
  func.func @transform_0(%arg0: i32, %arg1: i32) -> (i32, i32, i32) {
    %c0_i32 = arith.constant 0 : i32
    %c0_i32_0 = arith.constant 0 : i32
    return %arg0, %arg1, %c0_i32 : i32, i32, i32
  }
  func.func @transform_1(%arg0: i32, %arg1: i32) -> (i32, i32) {
    %c0_i32 = arith.constant 0 : i32
    %c0_i32_0 = arith.constant 0 : i32
    %c0_i32_1 = arith.constant 0 : i32
    return %c0_i32, %c0_i32_0 : i32, i32
  }
  func.func @transform_2(%arg0: i32, %arg1: i32) -> (i32, i32) {
    %c0_i32 = arith.constant 0 : i32
    %c0_i32_0 = arith.constant 0 : i32
    %c0_i32_1 = arith.constant 0 : i32
    return %c0_i32, %c0_i32_0 : i32, i32
  }
  func.func @transform_3(%arg0: i32, %arg1: i32) -> (i32, i32, i32) {
    %c0_i32 = arith.constant 0 : i32
    %c0_i32_0 = arith.constant 0 : i32
    return %arg0, %arg1, %c0_i32 : i32, i32, i32
  }
}

</mosaic_0001>

<llo_original>
// kernel: tpu_custom_call.1
$region0: #{tpu_custom_call.1}
  #allocation0 [shape = 'u32[]', space=smem, size = 0x4, offset = 0x4, fixed_abs, tag = 'smem constant byte address 0x4 - core index']
  #allocation1 [shape = 'u32[144,128]{1,0:T(1,128)}', space=vmem, size = 0x12000, scoped, tag = 'internal scratch']
  %s0 = inlined_call_operand.vmem [shape: bf16[2,128,16], index: 0, kind: input, shape index: {}]
  %s1 = inlined_call_operand.vmem [shape: bf16[16,32], index: 1, kind: input, shape index: {}]
  %s2 = inlined_call_operand.vmem [shape: f32[1,32], index: 2, kind: input, shape index: {}]
  %s3 = inlined_call_operand.vmem [shape: bf16[2,128,32], index: 3, kind: output, shape index: {}]
  %s4 = sld [smem:[#allocation0]]
  $region45: #{tpu_custom_call.1} parent=0
    _
  %s6 = ssub.s32 1, %s4
  %s7 = scalar_select 0, %s6, %s4
  loop: start=0, step=1, limit=4
  $region2: #{tpu_custom_call.1} parent=0 // loop_pre_header
    _
  $region3: #{tpu_custom_call.1} parent=0 // loop_header
    %s9 = sphi 0, %s13
    %p10 = scmp.ge.s32.totalorder %s9, 4
    %s16 = sphi 0, %s28
    %s17 = sphi 0, %s24
    %s18 = sphi 0, %s16
    %s19 = sphi 0, %s17
    %s20 = sphi 0, %s18
    %s21 = sphi 0, %s19
    %s33 = sphi 0, %s35
    %s36 = sphi 0, %s33
    %s37 = sphi 0, %s36
    %s53 = sphi 0, %s37
    %s57 = sphi 0, %s57
    %s59 = sphi 0, %s57
    %s60 = sphi 0, %s59
    %s74 = sphi 0, %s60
    %s78 = sphi 0, %s78
    %s80 = sphi 0, %s78
    %s81 = sphi 0, %s80
    %s95 = sphi 0, %s81
    %s103 = sphi 0, %s105
    %s106 = sphi 0, %s103
    %s107 = sphi 0, %s106
    %s123 = sphi 0, %s107
  $region4: #{tpu_custom_call.1} parent=0 // loop_header_branch
    %12 = sbr.rel (%p10) target = $region8
  $region5: #{tpu_custom_call.1} parent=0 // loop_body
    %s14 = ssub.s32 %s9, 1
    %s15 = ssub.s32 %s9, 2
    %s22 = sadd.s32 1, %s17
    %p23 = scmp.ge.s32.totalorder %s22, 1
    %s24 = scalar_select %p23, 0, %s22
    %s25 = sadd.s32 1, %s16
    %s26 = scalar_select %p23, %s25, %s16
    %p27 = scmp.ge.s32.totalorder %s26, 2
    %s28 = scalar_select %p27, 0, %s26
    %s29 = ssub.s32 %s16, %s28
    %s30 = ssub.s32 %s17, %s24
    %s31 = sor.u32 %s29, %s30
    %p32 = scmp.eq.s32.totalorder %s31, 0
    %s34 = sadd.s32 %s33, 1
    %s35 = scalar_select %p32, %s33, %s34
    %p38 = pneg %p32
    %p39 = scmp.eq.s32.totalorder %s9, 1
    %p40 = por %p38, %p39
    %p41 = scmp.ne.s32.totalorder %s33, %s36
    %p42 = scmp.eq.s32.totalorder %s9, 0
    %p43 = por %p41, %p42
    %p44 = scmp.ne.s32.totalorder %s33, %s36
    %p45 = scmp.eq.s32.totalorder %s14, 1
    %p46 = por %p44, %p45
    %p47 = scmp.ne.s32.totalorder %s36, %s37
    %p48 = scmp.eq.s32.totalorder %s14, 0
    %p49 = por %p47, %p48
    %p50 = scmp.ne.s32.totalorder %s36, %s37
    %p51 = scmp.eq.s32.totalorder %s15, 1
    %p52 = por %p50, %p51
    %p54 = scmp.ne.s32.totalorder %s37, %s53
    %p55 = scmp.eq.s32.totalorder %s15, 0
    %p56 = por %p54, %p55
    %s58 = sadd.s32 %s57, 1
    %p61 = scmp.eq.s32.totalorder %s9, 1
    %p62 = scmp.ne.s32.totalorder %s57, %s59
    %p63 = scmp.eq.s32.totalorder %s9, 0
    %p64 = por %p62, %p63
    %p65 = scmp.ne.s32.totalorder %s57, %s59
    %p66 = scmp.eq.s32.totalorder %s14, 1
    %p67 = por %p65, %p66
    %p68 = scmp.ne.s32.totalorder %s59, %s60
    %p69 = scmp.eq.s32.totalorder %s14, 0
    %p70 = por %p68, %p69
    %p71 = scmp.ne.s32.totalorder %s59, %s60
    %p72 = scmp.eq.s32.totalorder %s15, 1
    %p73 = por %p71, %p72
    %p75 = scmp.ne.s32.totalorder %s60, %s74
    %p76 = scmp.eq.s32.totalorder %s15, 0
    %p77 = por %p75, %p76
    %s79 = sadd.s32 %s78, 1
    %p82 = scmp.eq.s32.totalorder %s9, 1
    %p83 = scmp.ne.s32.totalorder %s78, %s80
    %p84 = scmp.eq.s32.totalorder %s9, 0
    %p85 = por %p83, %p84
    %p86 = scmp.ne.s32.totalorder %s78, %s80
    %p87 = scmp.eq.s32.totalorder %s14, 1
    %p88 = por %p86, %p87
    %p89 = scmp.ne.s32.totalorder %s80, %s81
    %p90 = scmp.eq.s32.totalorder %s14, 0
    %p91 = por %p89, %p90
    %p92 = scmp.ne.s32.totalorder %s80, %s81
    %p93 = scmp.eq.s32.totalorder %s15, 1
    %p94 = por %p92, %p93
    %p96 = scmp.ne.s32.totalorder %s81, %s95
    %p97 = scmp.eq.s32.totalorder %s15, 0
    %p98 = por %p96, %p97
    %s99 = ssub.s32 %s16, %s28
    %s100 = ssub.s32 %s17, %s24
    %s101 = sor.u32 %s99, %s100
    %p102 = scmp.eq.s32.totalorder %s101, 0
    %s104 = sadd.s32 %s103, 1
    %s105 = scalar_select %p102, %s103, %s104
    %p108 = pneg %p102
    %p109 = scmp.eq.s32.totalorder %s9, 1
    %p110 = por %p108, %p109
    %p111 = scmp.ne.s32.totalorder %s103, %s106
    %p112 = scmp.eq.s32.totalorder %s9, 0
    %p113 = por %p111, %p112
    %p114 = scmp.ne.s32.totalorder %s103, %s106
    %p115 = scmp.eq.s32.totalorder %s14, 1
    %p116 = por %p114, %p115
    %p117 = scmp.ne.s32.totalorder %s106, %s107
    %p118 = scmp.eq.s32.totalorder %s14, 0
    %p119 = por %p117, %p118
    %p120 = scmp.ne.s32.totalorder %s106, %s107
    %p121 = scmp.eq.s32.totalorder %s15, 1
    %p122 = por %p120, %p121
    %p124 = scmp.ne.s32.totalorder %s107, %s123
    %p125 = scmp.eq.s32.totalorder %s15, 0
    %p126 = por %p124, %p125
    %p127 = scmp.le.s32.totalorder 1, %s9
    %p128 = scmp.lt.s32.totalorder %s9, 3
    %p129 = pnand %p127, %p128
    %p130 = pneg %p129
    // Predicated region
    $region9: #{tpu_custom_call.1} parent=5 // pred_check
      _
    $region10: #{tpu_custom_call.1} parent=5 // pred_check_branch
      %132 = sbr.rel (%p129) target = $region12
    $region11: #{tpu_custom_call.1} parent=5 // pred_region
      %s133 = ssub.s32 %s9, 1
      // Predicated region
      $region13: #{tpu_custom_call.1} parent=11 // pred_check
        %p134 = pneg %p70
      $region14: #{tpu_custom_call.1} parent=11 // pred_check_branch
        %136 = sbr.rel (%p134) target = $region16
      $region15: #{tpu_custom_call.1} parent=11 // pred_region
        _
      $region16: #{tpu_custom_call.1} parent=11 // pred_fallthru
        _
      // Predicated region
      $region17: #{tpu_custom_call.1} parent=11 // pred_check
        %p137 = pneg %p91
      $region18: #{tpu_custom_call.1} parent=11 // pred_check_branch
        %139 = sbr.rel (%p137) target = $region20
      $region19: #{tpu_custom_call.1} parent=11 // pred_region
        _
      $region20: #{tpu_custom_call.1} parent=11 // pred_fallthru
        _
    $region12: #{tpu_custom_call.1} parent=5 // pred_fallthru
      _
    %p140 = scmp.lt.s32.totalorder %s9, 2
    // Predicated region
    $region21: #{tpu_custom_call.1} parent=5 // pred_check
      %p141 = pneg %p140
    $region22: #{tpu_custom_call.1} parent=5 // pred_check_branch
      %143 = sbr.rel (%p141) target = $region24
    $region23: #{tpu_custom_call.1} parent=5 // pred_region
      // Predicated region
      $region25: #{tpu_custom_call.1} parent=23 // pred_check
        %p144 = pneg %p43
      $region26: #{tpu_custom_call.1} parent=23 // pred_check_branch
        %146 = sbr.rel (%p144) target = $region28
      $region27: #{tpu_custom_call.1} parent=23 // pred_region
        %s147 = smul.u32 16, %s17
        %p148 = scmp.lt.s32.totalorder %s16, 1
        %s149 = scalar_select %p148, %s16, 1
        %p150 = scmp.lt.s32.totalorder %s147, 15
        %s151 = scalar_select %p150, %s147, 15
        %s152 = smul.addr %s149, 16
        %s153 = sadd.s32 %s151, %s152
        %s154 = smul.addr %s153, 4
        %s155 = scalar_lea.vmem %s0, %s154
        %s156 = smul.u32 16, %s17
      $region28: #{tpu_custom_call.1} parent=23 // pred_fallthru
        _
    $region24: #{tpu_custom_call.1} parent=5 // pred_fallthru
      _
    %p157 = scmp.le.s32.totalorder 1, %s9
    %p158 = scmp.lt.s32.totalorder %s9, 3
    %p159 = pnand %p157, %p158
    %p160 = pneg %p159
    // Predicated region
    $region29: #{tpu_custom_call.1} parent=5 // pred_check
      _
    $region30: #{tpu_custom_call.1} parent=5 // pred_check_branch
      %162 = sbr.rel (%p159) target = $region32
    $region31: #{tpu_custom_call.1} parent=5 // pred_region
      %s163 = ssub.s32 %s9, 1
      %s164 = smul.u32 16, %s19
      %p165 = scmp.lt.s32.totalorder %s18, 1
      %s166 = scalar_select %p165, %s18, 1
      %p167 = scmp.lt.s32.totalorder %s164, 15
      %s168 = scalar_select %p167, %s164, 15
      %s169 = smul.addr %s166, 16
      %s170 = sadd.s32 %s168, %s169
      %s171 = smul.addr %s170, 4
      %s172 = scalar_lea.vmem %s0, %s171
      %p173 = pneg %p49
      %p174 = pneg %p46
      %p175 = pneg %p70
      %p176 = pneg %p67
      %p177 = pneg %p91
      %p178 = pneg %p88
      %p179 = pneg %p119
      %p180 = pneg %p116
      %s181 = smul.u32 16, %s19
      %p182 = scmp.lt.s32.totalorder %s18, 1
      %s183 = scalar_select %p182, %s18, 1
      %p184 = scmp.lt.s32.totalorder %s181, 15
      %s185 = scalar_select %p184, %s181, 15
      %s186 = smul.addr %s183, 16
      %s187 = sadd.s32 %s185, %s186
      %s188 = smul.addr %s187, 4
      %s189 = scalar_lea.vmem %s3, %s188
      %s190 = smul.u32 16, %s19
      %p191 = scmp.lt.s32.totalorder %s18, 1
      %s192 = scalar_select %p191, %s18, 1
      %p193 = scmp.lt.s32.totalorder %s190, 15
      %s194 = scalar_select %p193, %s190, 15
      %s195 = smul.addr %s192, 16
      %s196 = sadd.s32 %s194, %s195
      %s197 = smul.addr %s196, 4
      %s198 = scalar_lea.vmem %s0, %s197
      %s199 = smul.u32 16, %s19
      %s200 = smul.u32 16, %s19
      %p201 = scmp.lt.s32.totalorder %s18, 1
      %s202 = scalar_select %p201, %s18, 1
      %p203 = scmp.lt.s32.totalorder %s200, 15
      %s204 = scalar_select %p203, %s200, 15
      %s205 = smul.addr %s202, 16
      %s206 = sadd.s32 %s204, %s205
      %s207 = smul.addr %s206, 4
      %s208 = scalar_lea.vmem %s3, %s207
      %s209 = smul.u32 16, %s19
      %v211 = vld [vmem:[%s198] sm:$0xf]
      %v212 = vld [vmem:[%s198 + $0x4] sm:$0xf]
      %v213 = vld [vmem:[%s198 + $0x8] sm:$0xf]
      %v214 = vld [vmem:[%s198 + $0xc] sm:$0xf]
      %v215 = vld [vmem:[%s198 + $0x10] sm:$0xf]
      %v216 = vld [vmem:[%s198 + $0x14] sm:$0xf]
      %v217 = vld [vmem:[%s198 + $0x18] sm:$0xf]
      %v218 = vld [vmem:[%s198 + $0x1c] sm:$0xf]
      %v219 = vld [vmem:[%s198 + $0x20] sm:$0xf]
      %v220 = vld [vmem:[%s198 + $0x24] sm:$0xf]
      %v221 = vld [vmem:[%s198 + $0x28] sm:$0xf]
      %v222 = vld [vmem:[%s198 + $0x2c] sm:$0xf]
      %v223 = vld [vmem:[%s198 + $0x30] sm:$0xf]
      %v224 = vld [vmem:[%s198 + $0x34] sm:$0xf]
      %v225 = vld [vmem:[%s198 + $0x38] sm:$0xf]
      %v226 = vld [vmem:[%s198 + $0x3c] sm:$0xf]
      %v227 = vld [vmem:[%s1] sm:$0xf]
      %v228 = vld [vmem:[%s1 + $0x4] sm:$0xf]
      %v229 = vld [vmem:[%s2] sm:$0x1]
      %v231 = vlaneseq
      %v232 = vshrl.u32 %v231, 7
      %v233 = vsub.s32 0, %v232
      %v234 = vrot.slane %v229, %v233
      %v252 = vunpack.c.l.b16 %v211
      %v253 = vunpack.c.l.b16 %v212
      %v254 = vunpack.c.l.b16 %v213
      %v255 = vunpack.c.l.b16 %v214
      %v256 = vunpack.c.l.b16 %v215
      %v257 = vunpack.c.l.b16 %v216
      %v258 = vunpack.c.l.b16 %v217
      %v259 = vunpack.c.l.b16 %v218
      %v260 = vunpack.c.l.b16 %v219
      %v261 = vunpack.c.l.b16 %v220
      %v262 = vunpack.c.l.b16 %v221
      %v263 = vunpack.c.l.b16 %v222
      %v264 = vunpack.c.l.b16 %v223
      %v265 = vunpack.c.l.b16 %v224
      %v266 = vunpack.c.l.b16 %v225
      %v267 = vunpack.c.l.b16 %v226
      %v268 = vpack.c.b16 %v253, %v252
      %v269 = vpack.c.b16 %v255, %v254
      %v270 = vpack.c.b16 %v257, %v256
      %v271 = vpack.c.b16 %v259, %v258
      %v272 = vpack.c.b16 %v261, %v260
      %v273 = vpack.c.b16 %v263, %v262
      %v274 = vpack.c.b16 %v265, %v264
      %v275 = vpack.c.b16 %v267, %v266
      %v278 = vunpack.c.l.b16 %v227
      %v279 = vunpack.c.l.b16 %v228
      %v280 = vpack.c.b16 %v279, %v278
      %vm282 = vcmask 130048
      %v284 = vsel %vm282, %v268, 0
      %v287 = vsel %vm282, %v269, 0
      %v290 = vsel %vm282, %v270, 0
      %v293 = vsel %vm282, %v271, 0
      %v296 = vsel %vm282, %v272, 0
      %v299 = vsel %vm282, %v273, 0
      %v302 = vsel %vm282, %v274, 0
      %v305 = vsel %vm282, %v275, 0
      %307 = vmatprep.subr.bf16.mxu0 0
      %308 = vmatpush1.bf16.msra.mxu0 %v280
      %309 = vmatprep.subr.bf16.mxu0 0
      %310 = vmatpush1.bf16.msra.mxu0 0
      %311 = vmatprep.subr.bf16.mxu0 0
      %312 = vmatpush1.bf16.msra.mxu0 0
      %313 = vmatprep.subr.bf16.mxu0 0
      %314 = vmatpush1.bf16.msra.mxu0 0
      %315 = vmatprep.subr.bf16.mxu0 0
      %316 = vmatpush1.bf16.msra.mxu0 0
      %317 = vmatprep.subr.bf16.mxu0 0
      %318 = vmatpush1.bf16.msra.mxu0 0
      %319 = vmatprep.subr.bf16.mxu0 0
      %320 = vmatpush1.bf16.msra.mxu0 0
      %321 = vmatprep.subr.bf16.mxu0 0
      %322 = vmatpush1.bf16.msra.mxu0 0
      %323 = vmatprep.subr.bf16.mxu0 0
      %324 = vmatpush1.bf16.msra.mxu0 0
      %325 = vmatprep.subr.bf16.mxu0 0
      %326 = vmatpush1.bf16.msra.mxu0 0
      %327 = vmatprep.subr.bf16.mxu0 0
      %328 = vmatpush1.bf16.msra.mxu0 0
      %329 = vmatprep.subr.bf16.mxu0 0
      %330 = vmatpush1.bf16.msra.mxu0 0
      %331 = vmatprep.subr.bf16.mxu0 0
      %332 = vmatpush1.bf16.msra.mxu0 0
      %333 = vmatprep.subr.bf16.mxu0 0
      %334 = vmatpush1.bf16.msra.mxu0 0
      %335 = vmatprep.subr.bf16.mxu0 0
      %336 = vmatpush1.bf16.msra.mxu0 0
      %337 = vmatprep.subr.bf16.mxu0 0
      %338 = vmatpush1.bf16.msra.mxu0 0
      %339 = vmatprep.mubr.bf16.mxu0 0
      %340 = vmatmul.mubr.bf16.gmra.mrb[0].mxu0 %v284
      %v341 = vpop.f32.mrb[0].mxu0
      %v342 = vadd.f32 %v234, %v341
      %v343 = vpop.f32.mrb[0].mxu0
      %v344 = vpop.f32.mrb[0].mxu0
      %v345 = vadd.f32 %v234, %v344
      %v346 = vpop.f32.mrb[0].mxu0
      %347 = vmatprep.mubr.bf16.mxu0 0
      %348 = vmatmul.mubr.bf16.gmra.mrb[0].mxu0 %v287
      %v349 = vpop.f32.mrb[0].mxu0
      %v350 = vadd.f32 %v234, %v349
      %v351 = vpop.f32.mrb[0].mxu0
      %v352 = vpop.f32.mrb[0].mxu0
      %v353 = vadd.f32 %v234, %v352
      %v354 = vpop.f32.mrb[0].mxu0
      %355 = vmatprep.mubr.bf16.mxu0 0
      %356 = vmatmul.mubr.bf16.gmra.mrb[0].mxu0 %v290
      %v357 = vpop.f32.mrb[0].mxu0
      %v358 = vadd.f32 %v234, %v357
      %v359 = vpop.f32.mrb[0].mxu0
      %v360 = vpop.f32.mrb[0].mxu0
      %v361 = vadd.f32 %v234, %v360
      %v362 = vpop.f32.mrb[0].mxu0
      %363 = vmatprep.mubr.bf16.mxu0 0
      %364 = vmatmul.mubr.bf16.gmra.mrb[0].mxu0 %v293
      %v365 = vpop.f32.mrb[0].mxu0
      %v366 = vadd.f32 %v234, %v365
      %v367 = vpop.f32.mrb[0].mxu0
      %v368 = vpop.f32.mrb[0].mxu0
      %v369 = vadd.f32 %v234, %v368
      %v370 = vpop.f32.mrb[0].mxu0
      %371 = vmatprep.mubr.bf16.mxu0 0
      %372 = vmatmul.mubr.bf16.gmra.mrb[0].mxu0 %v296
      %v373 = vpop.f32.mrb[0].mxu0
      %v374 = vadd.f32 %v234, %v373
      %v375 = vpop.f32.mrb[0].mxu0
      %v376 = vpop.f32.mrb[0].mxu0
      %v377 = vadd.f32 %v234, %v376
      %v378 = vpop.f32.mrb[0].mxu0
      %379 = vmatprep.mubr.bf16.mxu0 0
      %380 = vmatmul.mubr.bf16.gmra.mrb[0].mxu0 %v299
      %v381 = vpop.f32.mrb[0].mxu0
      %v382 = vadd.f32 %v234, %v381
      %v383 = vpop.f32.mrb[0].mxu0
      %v384 = vpop.f32.mrb[0].mxu0
      %v385 = vadd.f32 %v234, %v384
      %v386 = vpop.f32.mrb[0].mxu0
      %387 = vmatprep.mubr.bf16.mxu0 0
      %388 = vmatmul.mubr.bf16.gmra.mrb[0].mxu0 %v302
      %v389 = vpop.f32.mrb[0].mxu0
      %v390 = vadd.f32 %v234, %v389
      %v391 = vpop.f32.mrb[0].mxu0
      %v392 = vpop.f32.mrb[0].mxu0
      %v393 = vadd.f32 %v234, %v392
      %v394 = vpop.f32.mrb[0].mxu0
      %395 = vmatprep.mubr.bf16.mxu0 0
      %396 = vmatmul.mubr.bf16.gmra.mrb[0].mxu0 %v305
      %v397 = vpop.f32.mrb[0].mxu0
      %v398 = vadd.f32 %v234, %v397
      %v399 = vpop.f32.mrb[0].mxu0
      %v400 = vpop.f32.mrb[0].mxu0
      %v401 = vadd.f32 %v234, %v400
      %v402 = vpop.f32.mrb[0].mxu0
      %403 = vdwg.mxu0
      %v404 = vpack.c.bf16 %v345, %v342
      %v405 = vpack.c.bf16 %v353, %v350
      %v406 = vpack.c.bf16 %v361, %v358
      %v407 = vpack.c.bf16 %v369, %v366
      %v408 = vpack.c.bf16 %v377, %v374
      %v409 = vpack.c.bf16 %v385, %v382
      %v410 = vpack.c.bf16 %v393, %v390
      %v411 = vpack.c.bf16 %v401, %v398
      %v420 = vunpack.c.l.b16 %v404
      %v421 = vunpack.c.h.b16 %v404
      %v422 = vunpack.c.l.b16 %v405
      %v423 = vunpack.c.h.b16 %v405
      %v424 = vunpack.c.l.b16 %v406
      %v425 = vunpack.c.h.b16 %v406
      %v426 = vunpack.c.l.b16 %v407
      %v427 = vunpack.c.h.b16 %v407
      %v428 = vunpack.c.l.b16 %v408
      %v429 = vunpack.c.h.b16 %v408
      %v430 = vunpack.c.l.b16 %v409
      %v431 = vunpack.c.h.b16 %v409
      %v432 = vunpack.c.l.b16 %v410
      %v433 = vunpack.c.h.b16 %v410
      %v434 = vunpack.c.l.b16 %v411
      %v435 = vunpack.c.h.b16 %v411
      %v436 = vpack.c.b16 %v420, %v420
      %v437 = vpack.c.b16 %v421, %v421
      %v438 = vpack.c.b16 %v422, %v422
      %v439 = vpack.c.b16 %v423, %v423
      %v440 = vpack.c.b16 %v424, %v424
      %v441 = vpack.c.b16 %v425, %v425
      %v442 = vpack.c.b16 %v426, %v426
      %v443 = vpack.c.b16 %v427, %v427
      %v444 = vpack.c.b16 %v428, %v428
      %v445 = vpack.c.b16 %v429, %v429
      %v446 = vpack.c.b16 %v430, %v430
      %v447 = vpack.c.b16 %v431, %v431
      %v448 = vpack.c.b16 %v432, %v432
      %v449 = vpack.c.b16 %v433, %v433
      %v450 = vpack.c.b16 %v434, %v434
      %v451 = vpack.c.b16 %v435, %v435
      %vm468 = vcmask 257024
      %469 = vst.msk [vmem:[%s208] sm:$0xf] %vm468, %v436
      %470 = vst.msk [vmem:[%s208 + $0x4] sm:$0xf] %vm468, %v437
      %471 = vst.msk [vmem:[%s208 + $0x8] sm:$0xf] %vm468, %v438
      %472 = vst.msk [vmem:[%s208 + $0xc] sm:$0xf] %vm468, %v439
      %473 = vst.msk [vmem:[%s208 + $0x10] sm:$0xf] %vm468, %v440
      %474 = vst.msk [vmem:[%s208 + $0x14] sm:$0xf] %vm468, %v441
      %475 = vst.msk [vmem:[%s208 + $0x18] sm:$0xf] %vm468, %v442
      %476 = vst.msk [vmem:[%s208 + $0x1c] sm:$0xf] %vm468, %v443
      %477 = vst.msk [vmem:[%s208 + $0x20] sm:$0xf] %vm468, %v444
      %478 = vst.msk [vmem:[%s208 + $0x24] sm:$0xf] %vm468, %v445
      %479 = vst.msk [vmem:[%s208 + $0x28] sm:$0xf] %vm468, %v446
      %480 = vst.msk [vmem:[%s208 + $0x2c] sm:$0xf] %vm468, %v447
      %481 = vst.msk [vmem:[%s208 + $0x30] sm:$0xf] %vm468, %v448
      %482 = vst.msk [vmem:[%s208 + $0x34] sm:$0xf] %vm468, %v449
      %483 = vst.msk [vmem:[%s208 + $0x38] sm:$0xf] %vm468, %v450
      %484 = vst.msk [vmem:[%s208 + $0x3c] sm:$0xf] %vm468, %v451
      %s485 = smul.u32 16, %s19
      %p486 = scmp.lt.s32.totalorder %s18, 1
      %s487 = scalar_select %p486, %s18, 1
      %p488 = scmp.lt.s32.totalorder %s485, 15
      %s489 = scalar_select %p488, %s485, 15
      %s490 = smul.addr %s487, 16
      %s491 = sadd.s32 %s489, %s490
      %s492 = smul.addr %s491, 4
      %s493 = scalar_lea.vmem %s3, %s492
      // Predicated region
      $region33: #{tpu_custom_call.1} parent=31 // pred_check
        %p494 = pneg %p116
      $region34: #{tpu_custom_call.1} parent=31 // pred_check_branch
        %496 = sbr.rel (%p494) target = $region36
      $region35: #{tpu_custom_call.1} parent=31 // pred_region
        %s497 = smul.u32 16, %s19
      $region36: #{tpu_custom_call.1} parent=31 // pred_fallthru
        _
    $region32: #{tpu_custom_call.1} parent=5 // pred_fallthru
      _
    %p498 = scmp.le.s32.totalorder 2, %s9
    // Predicated region
    $region37: #{tpu_custom_call.1} parent=5 // pred_check
      %p499 = pneg %p498
    $region38: #{tpu_custom_call.1} parent=5 // pred_check_branch
      %501 = sbr.rel (%p499) target = $region40
    $region39: #{tpu_custom_call.1} parent=5 // pred_region
      %s502 = ssub.s32 %s9, 2
      // Predicated region
      $region41: #{tpu_custom_call.1} parent=39 // pred_check
        %p503 = pneg %p122
      $region42: #{tpu_custom_call.1} parent=39 // pred_check_branch
        %505 = sbr.rel (%p503) target = $region44
      $region43: #{tpu_custom_call.1} parent=39 // pred_region
        %s506 = smul.u32 16, %s21
        %p507 = scmp.lt.s32.totalorder %s20, 1
        %s508 = scalar_select %p507, %s20, 1
        %p509 = scmp.lt.s32.totalorder %s506, 15
        %s510 = scalar_select %p509, %s506, 15
        %s511 = smul.addr %s508, 16
        %s512 = sadd.s32 %s510, %s511
        %s513 = smul.addr %s512, 4
        %s514 = scalar_lea.vmem %s3, %s513
      $region44: #{tpu_custom_call.1} parent=39 // pred_fallthru
        _
    $region40: #{tpu_custom_call.1} parent=5 // pred_fallthru
      _
  $region6: #{tpu_custom_call.1} parent=0 // loop_footer
    %s13 = sadd.s32 1, %s9
  $region7: #{tpu_custom_call.1} parent=0 // loop_footer_branch
    %8 = sbr.rel target = $region3
  $region8: #{tpu_custom_call.1} parent=0 // loop_exit
    _

</llo_original>
